<compile_context>
chip_gen: v6e
topology: v6e:2x2x1
jax: 0.10.0
libtpu: 0.0.40
codegen_flags: <defaults>
</compile_context>

<pallas_src>
import functools

import jax
import jax.numpy as jnp
import numpy as np
from jax.experimental import pallas as pl
from jax.experimental.pallas import tpu as pltpu


# ---------------------------------------------------------------------------
# Pallas kernel: fused MLP   h = e;  for each layer: h = maybe_relu(h @ W + b)
# ---------------------------------------------------------------------------
def _mlp_kernel(*refs, num_layers):
    """refs = (e_ref, w0_ref, b0_ref, w1_ref, b1_ref, ..., o_ref)."""
    x_ref, o_ref = refs[0], refs[-1]
    h = x_ref[...]                                         # (tile_m, f0) f32
    for li in range(num_layers):                           # static unroll
        w = refs[1 + 2 * li][...]                          # (f_li, f_li+1) bf16
        b = refs[2 + 2 * li][...]                          # (1, f_li+1)    f32
        acc = jnp.dot(h.astype(jnp.bfloat16), w,
                      preferred_element_type=jnp.float32)  # MXU, f32 acc
        h = acc + b                                        # f32 epilogue (VPU)
        if li < num_layers - 1:
            h = jnp.maximum(h, 0.0)                        # ReLU on hidden
    o_ref[...] = h.astype(o_ref.dtype)


def prober_forward(e, params):
    """Fused Prober forward.  e: (..., embedding) -> (..., output_dim)."""
    weights = params["weights"]                 # list[(f_in, f_out)] f32
    biases = params["biases"]                   # list[(f_out,)]      f32
    num_layers = len(weights)
    out_dim = weights[-1].shape[1]

    lead = e.shape[:-1]
    e2 = e.reshape(-1, e.shape[-1]).astype(jnp.float32)
    M, K0 = e2.shape

    # Batch tiling: tile_m always divides M exactly (no pad + slice glue).
    # Split into 2 blocks (megacore "parallel" on v7x) only when the batch is
    # big enough to amortize per-grid-step overhead; otherwise one full block.
    if M % 16 == 0 and M >= 128:
        tile_m = M // 2
    else:
        tile_m = M
    grid = (M // tile_m,)

    operands = [e2]
    in_specs = [pl.BlockSpec((tile_m, K0), lambda i: (i, 0))]
    for w, b in zip(weights, biases):
        fin, fout = w.shape
        operands.append(w.astype(jnp.bfloat16))            # bf16 MXU operand
        in_specs.append(pl.BlockSpec((fin, fout), lambda i: (0, 0)))
        operands.append(b.reshape(1, fout).astype(jnp.float32))
        in_specs.append(pl.BlockSpec((1, fout), lambda i: (0, 0)))

    out = pl.pallas_call(
        functools.partial(_mlp_kernel, num_layers=num_layers),
        out_shape=jax.ShapeDtypeStruct((M, out_dim), jnp.float32),
        grid=grid,
        in_specs=in_specs,
        out_specs=pl.BlockSpec((tile_m, out_dim), lambda i: (i, 0)),
        compiler_params=pltpu.CompilerParams(
            dimension_semantics=("parallel",)),
    )(*operands)
    return out.reshape(*lead, out_dim)


# ---------------------------------------------------------------------------
# Deterministic parameter init (matches Prober.__init__ / torch.nn.Linear)
# ---------------------------------------------------------------------------
def init_params(key, embedding=32, arch="64-32", output_shape=(4, 2)):
    arch_list = [int(s) for s in arch.split("-")] if arch != "" else []
    out_dim = int(np.prod(output_shape))
    f = [embedding] + arch_list + [out_dim]
    weights, biases = [], []
    for i in range(len(f) - 1):
        key, kw, kb = jax.random.split(key, 3)
        bound = 1.0 / np.sqrt(f[i])                        # torch Linear init
        weights.append(jax.random.uniform(
            kw, (f[i], f[i + 1]), jnp.float32, -bound, bound))
        biases.append(jax.random.uniform(
            kb, (f[i + 1],), jnp.float32, -bound, bound))
    return {"weights": weights, "biases": biases}


# ---------------------------------------------------------------------------
# Pure-JAX f32 reference for verification
# ---------------------------------------------------------------------------
def ref_forward(e, params):
    h = e
    n = len(params["weights"])
    for i, (w, b) in enumerate(zip(params["weights"], params["biases"])):
        h = h @ w + b
        if i < n - 1:
            h = jnp.maximum(h, 0.0)
    return h


if __name__ == "__main__":
    embedding = 32
    arch = "64-32"           # two hidden Linear+ReLU layers, then output Linear
    output_shape = (4, 2)    # output_dim = 8
    batch = 64

    key = jax.random.PRNGKey(0)
    key, kx = jax.random.split(key)
    e = jax.random.normal(kx, (batch, embedding), jnp.float32)
    params = init_params(key, embedding, arch, output_shape)

    fwd = jax.jit(prober_forward)
    out = jax.block_until_ready(fwd(e, params))
    assert out.shape == (batch, int(np.prod(output_shape))), out.shape

    ref = jax.block_until_ready(ref_forward(e, params))
    np.testing.assert_allclose(np.asarray(out), np.asarray(ref),
                               rtol=2e-2, atol=2e-2)
    print("KERNEL_OK")
</pallas_src>

<mosaic_0001>
module attributes {stable_mosaic.version = 11 : i64} {
  func.func @_mlp_kernel(%arg0: i32, %arg1: memref<64x32xf32, #tpu.memory_space<vmem>>, %arg2: memref<32x64xbf16, #tpu.memory_space<vmem>>, %arg3: memref<1x64xf32, #tpu.memory_space<vmem>>, %arg4: memref<64x32xbf16, #tpu.memory_space<vmem>>, %arg5: memref<1x32xf32, #tpu.memory_space<vmem>>, %arg6: memref<32x8xbf16, #tpu.memory_space<vmem>>, %arg7: memref<1x8xf32, #tpu.memory_space<vmem>>, %arg8: memref<64x8xf32, #tpu.memory_space<vmem>>) attributes {dimension_semantics = [#tpu.dimension_semantics<parallel>], iteration_bounds = array<i64: 1>, scalar_prefetch = 0 : i64, scratch_operands = 0 : i64, tpu.core_type = #tpu.core_type<tc>, window_params = [{transform_indices = @transform_0, window_bounds = array<i64: 64, 32>}, {pipeline_mode = #tpu.pipeline_mode<synchronous>, transform_indices = @transform_1, window_bounds = array<i64: 32, 64>}, {pipeline_mode = #tpu.pipeline_mode<synchronous>, transform_indices = @transform_2, window_bounds = array<i64: 1, 64>}, {pipeline_mode = #tpu.pipeline_mode<synchronous>, transform_indices = @transform_3, window_bounds = array<i64: 64, 32>}, {pipeline_mode = #tpu.pipeline_mode<synchronous>, transform_indices = @transform_4, window_bounds = array<i64: 1, 32>}, {pipeline_mode = #tpu.pipeline_mode<synchronous>, transform_indices = @transform_5, window_bounds = array<i64: 32, 8>}, {pipeline_mode = #tpu.pipeline_mode<synchronous>, transform_indices = @transform_6, window_bounds = array<i64: 1, 8>}, {transform_indices = @transform_7, window_bounds = array<i64: 64, 8>}]} {
    %c0 = arith.constant 0 : index
    %c0_0 = arith.constant 0 : index
    %0 = vector.load %arg1[%c0, %c0_0] : memref<64x32xf32, #tpu.memory_space<vmem>>, vector<64x32xf32>
    %c0_1 = arith.constant 0 : index
    %c0_2 = arith.constant 0 : index
    %1 = vector.load %arg2[%c0_1, %c0_2] : memref<32x64xbf16, #tpu.memory_space<vmem>>, vector<32x64xbf16>
    %c0_3 = arith.constant 0 : index
    %c0_4 = arith.constant 0 : index
    %2 = vector.load %arg3[%c0_3, %c0_4] : memref<1x64xf32, #tpu.memory_space<vmem>>, vector<1x64xf32>
    %3 = arith.truncf %0 : vector<64x32xf32> to vector<64x32xbf16>
    %cst = arith.constant dense<0.000000e+00> : vector<64x64xf32>
    %4 = tpu.matmul %3, %1, %cst {dimension_numbers = #tpu.dot_dimension_numbers<[1], [0], [0], [1], [0, 0, 1, 1], [], []>} : vector<64x32xbf16>, vector<32x64xbf16>, vector<64x64xf32> -> vector<64x64xf32>
    %5 = vector.broadcast %2 : vector<1x64xf32> to vector<64x64xf32>
    %6 = arith.addf %4, %5 : vector<64x64xf32>
    %cst_5 = arith.constant 0.000000e+00 : f32
    %7 = vector.broadcast %cst_5 : f32 to vector<64x64xf32>
    %8 = arith.maximumf %6, %7 : vector<64x64xf32>
    %c0_6 = arith.constant 0 : index
    %c0_7 = arith.constant 0 : index
    %9 = vector.load %arg4[%c0_6, %c0_7] : memref<64x32xbf16, #tpu.memory_space<vmem>>, vector<64x32xbf16>
    %c0_8 = arith.constant 0 : index
    %c0_9 = arith.constant 0 : index
    %10 = vector.load %arg5[%c0_8, %c0_9] : memref<1x32xf32, #tpu.memory_space<vmem>>, vector<1x32xf32>
    %11 = arith.truncf %8 : vector<64x64xf32> to vector<64x64xbf16>
    %cst_10 = arith.constant dense<0.000000e+00> : vector<64x32xf32>
    %12 = tpu.matmul %11, %9, %cst_10 {dimension_numbers = #tpu.dot_dimension_numbers<[1], [0], [0], [1], [0, 0, 1, 1], [], []>} : vector<64x64xbf16>, vector<64x32xbf16>, vector<64x32xf32> -> vector<64x32xf32>
    %13 = vector.broadcast %10 : vector<1x32xf32> to vector<64x32xf32>
    %14 = arith.addf %12, %13 : vector<64x32xf32>
    %cst_11 = arith.constant 0.000000e+00 : f32
    %15 = vector.broadcast %cst_11 : f32 to vector<64x32xf32>
    %16 = arith.maximumf %14, %15 : vector<64x32xf32>
    %c0_12 = arith.constant 0 : index
    %c0_13 = arith.constant 0 : index
    %17 = vector.load %arg6[%c0_12, %c0_13] : memref<32x8xbf16, #tpu.memory_space<vmem>>, vector<32x8xbf16>
    %c0_14 = arith.constant 0 : index
    %c0_15 = arith.constant 0 : index
    %18 = vector.load %arg7[%c0_14, %c0_15] : memref<1x8xf32, #tpu.memory_space<vmem>>, vector<1x8xf32>
    %19 = arith.truncf %16 : vector<64x32xf32> to vector<64x32xbf16>
    %cst_16 = arith.constant dense<0.000000e+00> : vector<64x8xf32>
    %20 = tpu.matmul %19, %17, %cst_16 {dimension_numbers = #tpu.dot_dimension_numbers<[1], [0], [0], [1], [0, 0, 1, 1], [], []>} : vector<64x32xbf16>, vector<32x8xbf16>, vector<64x8xf32> -> vector<64x8xf32>
    %21 = vector.broadcast %18 : vector<1x8xf32> to vector<64x8xf32>
    %22 = arith.addf %20, %21 : vector<64x8xf32>
    %c0_17 = arith.constant 0 : index
    %c0_18 = arith.constant 0 : index
    %23 = vector.load %arg8[%c0_17, %c0_18] : memref<64x8xf32, #tpu.memory_space<vmem>>, vector<64x8xf32>
    tpu.vector_store %arg8[%c0_17, %c0_18], %22 {strides = array<i32>} : memref<64x8xf32, #tpu.memory_space<vmem>>, vector<64x8xf32>,
    return
  }
  func.func @transform_0(%arg0: i32) -> (i32, i32) {
    %c0_i32 = arith.constant 0 : i32
    %c0_i32_0 = arith.constant 0 : i32
    return %arg0, %c0_i32 : i32, i32
  }
  func.func @transform_1(%arg0: i32) -> (i32, i32) {
    %c0_i32 = arith.constant 0 : i32
    %c0_i32_0 = arith.constant 0 : i32
    %c0_i32_1 = arith.constant 0 : i32
    return %c0_i32, %c0_i32_0 : i32, i32
  }
  func.func @transform_2(%arg0: i32) -> (i32, i32) {
    %c0_i32 = arith.constant 0 : i32
    %c0_i32_0 = arith.constant 0 : i32
    %c0_i32_1 = arith.constant 0 : i32
    return %c0_i32, %c0_i32_0 : i32, i32
  }
  func.func @transform_3(%arg0: i32) -> (i32, i32) {
    %c0_i32 = arith.constant 0 : i32
    %c0_i32_0 = arith.constant 0 : i32
    %c0_i32_1 = arith.constant 0 : i32
    return %c0_i32, %c0_i32_0 : i32, i32
  }
  func.func @transform_4(%arg0: i32) -> (i32, i32) {
    %c0_i32 = arith.constant 0 : i32
    %c0_i32_0 = arith.constant 0 : i32
    %c0_i32_1 = arith.constant 0 : i32
    return %c0_i32, %c0_i32_0 : i32, i32
  }
  func.func @transform_5(%arg0: i32) -> (i32, i32) {
    %c0_i32 = arith.constant 0 : i32
    %c0_i32_0 = arith.constant 0 : i32
    %c0_i32_1 = arith.constant 0 : i32
    return %c0_i32, %c0_i32_0 : i32, i32
  }
  func.func @transform_6(%arg0: i32) -> (i32, i32) {
    %c0_i32 = arith.constant 0 : i32
    %c0_i32_0 = arith.constant 0 : i32
    %c0_i32_1 = arith.constant 0 : i32
    return %c0_i32, %c0_i32_0 : i32, i32
  }
  func.func @transform_7(%arg0: i32) -> (i32, i32) {
    %c0_i32 = arith.constant 0 : i32
    %c0_i32_0 = arith.constant 0 : i32
    return %arg0, %c0_i32 : i32, i32
  }
}

</mosaic_0001>

<llo_original>
// kernel: prober_forward.1
$region0: #{prober_forward.1}
  #allocation0 [shape = 'u32[]', space=smem, size = 0x4, offset = 0x4, fixed_abs, tag = 'smem constant byte address 0x4 - core index']
  #allocation1 [shape = 'u32[144,128]{1,0:T(1,128)}', space=vmem, size = 0x12000, scoped, tag = 'internal scratch']
  %s0 = inlined_call_operand.vmem [shape: f32[64,32], index: 0, kind: input, shape index: {}]
  %s1 = inlined_call_operand.vmem [shape: bf16[32,64], index: 1, kind: input, shape index: {}]
  %s2 = inlined_call_operand.vmem [shape: f32[1,64], index: 2, kind: input, shape index: {}]
  %s3 = inlined_call_operand.vmem [shape: bf16[64,32], index: 3, kind: input, shape index: {}]
  %s4 = inlined_call_operand.vmem [shape: f32[1,32], index: 4, kind: input, shape index: {}]
  %s5 = inlined_call_operand.vmem [shape: bf16[32,8], index: 5, kind: input, shape index: {}]
  %s6 = inlined_call_operand.vmem [shape: f32[1,8], index: 6, kind: input, shape index: {}]
  %s7 = inlined_call_operand.vmem [shape: f32[64,8], index: 7, kind: output, shape index: {}]
  %s8 = sld [smem:[#allocation0]]
  $region38: #{prober_forward.1} parent=0
    _
  %s10 = ssub.s32 1, %s8
  %s11 = scalar_select 0, %s10, %s8
  // Predicated region
  $region2: #{prober_forward.1} parent=0 // pred_check
    _
  $region3: #{prober_forward.1} parent=0 // pred_check_branch
    %13 = sbr.rel (0) target = $region5
  $region4: #{prober_forward.1} parent=0 // pred_region
    _
  $region5: #{prober_forward.1} parent=0 // pred_fallthru
    _
  // Predicated region
  $region6: #{prober_forward.1} parent=0 // pred_check
    _
  $region7: #{prober_forward.1} parent=0 // pred_check_branch
    %15 = sbr.rel (0) target = $region9
  $region8: #{prober_forward.1} parent=0 // pred_region
    _
  $region9: #{prober_forward.1} parent=0 // pred_fallthru
    _
  // Predicated region
  $region10: #{prober_forward.1} parent=0 // pred_check
    _
  $region11: #{prober_forward.1} parent=0 // pred_check_branch
    %17 = sbr.rel (0) target = $region13
  $region12: #{prober_forward.1} parent=0 // pred_region
    _
  $region13: #{prober_forward.1} parent=0 // pred_fallthru
    _
  // Predicated region
  $region14: #{prober_forward.1} parent=0 // pred_check
    _
  $region15: #{prober_forward.1} parent=0 // pred_check_branch
    %19 = sbr.rel (0) target = $region17
  $region16: #{prober_forward.1} parent=0 // pred_region
    _
  $region17: #{prober_forward.1} parent=0 // pred_fallthru
    _
  // Predicated region
  $region18: #{prober_forward.1} parent=0 // pred_check
    _
  $region19: #{prober_forward.1} parent=0 // pred_check_branch
    %21 = sbr.rel (0) target = $region21
  $region20: #{prober_forward.1} parent=0 // pred_region
    _
  $region21: #{prober_forward.1} parent=0 // pred_fallthru
    _
  // Predicated region
  $region22: #{prober_forward.1} parent=0 // pred_check
    _
  $region23: #{prober_forward.1} parent=0 // pred_check_branch
    %23 = sbr.rel (0) target = $region25
  $region24: #{prober_forward.1} parent=0 // pred_region
    _
  $region25: #{prober_forward.1} parent=0 // pred_fallthru
    _
  // Predicated region
  $region26: #{prober_forward.1} parent=0 // pred_check
    _
  $region27: #{prober_forward.1} parent=0 // pred_check_branch
    %25 = sbr.rel (0) target = $region29
  $region28: #{prober_forward.1} parent=0 // pred_region
    _
  $region29: #{prober_forward.1} parent=0 // pred_fallthru
    _
  %v27 = vld [vmem:[%s0] sm:$0xff]
  %v28 = vld [vmem:[%s0 + $0x8] sm:$0xff]
  %v29 = vld [vmem:[%s0 + $0x10] sm:$0xff]
  %v30 = vld [vmem:[%s0 + $0x18] sm:$0xff]
  %v31 = vld [vmem:[%s0 + $0x20] sm:$0xff]
  %v32 = vld [vmem:[%s0 + $0x28] sm:$0xff]
  %v33 = vld [vmem:[%s0 + $0x30] sm:$0xff]
  %v34 = vld [vmem:[%s0 + $0x38] sm:$0xff]
  %v35 = vld [vmem:[%s1] sm:$0xf]
  %v36 = vld [vmem:[%s1 + $0x4] sm:$0xf]
  %v37 = vld [vmem:[%s1 + $0x8] sm:$0xf]
  %v38 = vld [vmem:[%s1 + $0xc] sm:$0xf]
  %v39 = vld [vmem:[%s2] sm:$0x1]
  %v40 = vpack.c.bf16 %v28, %v27
  %v41 = vpack.c.bf16 %v30, %v29
  %v42 = vpack.c.bf16 %v32, %v31
  %v43 = vpack.c.bf16 %v34, %v33
  %v45 = vlaneseq
  %v46 = vshrl.u32 %v45, 7
  %v47 = vsub.s32 0, %v46
  %v48 = vrot.slane %v39, %v47
  %v54 = vunpack.c.l.b16 %v35
  %v55 = vunpack.c.l.b16 %v36
  %v56 = vunpack.c.l.b16 %v37
  %v57 = vunpack.c.l.b16 %v38
  %v58 = vpack.c.b16 %v55, %v54
  %v59 = vpack.c.b16 %v57, %v56
  %vm62 = vcmask 261120
  %v64 = vsel %vm62, %v40, 0
  %v67 = vsel %vm62, %v41, 0
  %v70 = vsel %vm62, %v42, 0
  %v73 = vsel %vm62, %v43, 0
  %75 = vmatprep.subr.bf16.mxu0 0
  %76 = vmatpush1.bf16.msra.mxu0 0
  %77 = vmatprep.subr.bf16.mxu0 0
  %78 = vmatpush1.bf16.msra.mxu0 0
  %79 = vmatprep.subr.bf16.mxu0 0
  %80 = vmatpush1.bf16.msra.mxu0 0
  %81 = vmatprep.subr.bf16.mxu0 0
  %82 = vmatpush1.bf16.msra.mxu0 0
  %83 = vmatprep.subr.bf16.mxu0 0
  %84 = vmatpush1.bf16.msra.mxu0 0
  %85 = vmatprep.subr.bf16.mxu0 0
  %86 = vmatpush1.bf16.msra.mxu0 0
  %87 = vmatprep.subr.bf16.mxu0 0
  %88 = vmatpush1.bf16.msra.mxu0 %v59
  %89 = vmatprep.subr.bf16.mxu0 0
  %90 = vmatpush1.bf16.msra.mxu0 %v58
  %91 = vmatprep.subr.bf16.mxu0 0
  %92 = vmatpush2.bf16.msra.mxu0 0
  %93 = vmatprep.subr.bf16.mxu0 0
  %94 = vmatpush2.bf16.msra.mxu0 0
  %95 = vmatprep.subr.bf16.mxu0 0
  %96 = vmatpush2.bf16.msra.mxu0 0
  %97 = vmatprep.subr.bf16.mxu0 0
  %98 = vmatpush2.bf16.msra.mxu0 0
  %99 = vmatprep.subr.bf16.mxu0 0
  %100 = vmatpush2.bf16.msra.mxu0 0
  %101 = vmatprep.subr.bf16.mxu0 0
  %102 = vmatpush2.bf16.msra.mxu0 0
  %103 = vmatprep.subr.bf16.mxu0 0
  %104 = vmatpush2.bf16.msra.mxu0 0
  %105 = vmatprep.subr.bf16.mxu0 0
  %106 = vmatpush2.bf16.msra.mxu0 0
  %107 = vmatprep.mubr.bf16.mxu0 0
  %108 = vmatmul.mubr.bf16.gmra.mxu0 %v64
  %v109 = vpop.f32.mrf.mxu0
  %v110 = vadd.f32 %v48, %v109
  %v111 = vpop.f32.mrf.mxu0
  %v112 = vpop.f32.mrf.mxu0
  %v113 = vadd.f32 %v48, %v112
  %v114 = vpop.f32.mrf.mxu0
  %115 = vmatprep.mubr.bf16.mxu0 0
  %116 = vmatmul.mubr.bf16.gmra.mxu0 %v67
  %v117 = vpop.f32.mrf.mxu0
  %v118 = vadd.f32 %v48, %v117
  %v119 = vpop.f32.mrf.mxu0
  %v120 = vpop.f32.mrf.mxu0
  %v121 = vadd.f32 %v48, %v120
  %v122 = vpop.f32.mrf.mxu0
  %123 = vmatprep.mubr.bf16.mxu0 0
  %124 = vmatmul.mubr.bf16.gmra.mxu0 %v70
  %v125 = vpop.f32.mrf.mxu0
  %v126 = vadd.f32 %v48, %v125
  %v127 = vpop.f32.mrf.mxu0
  %v128 = vpop.f32.mrf.mxu0
  %v129 = vadd.f32 %v48, %v128
  %v130 = vpop.f32.mrf.mxu0
  %131 = vmatprep.mubr.bf16.mxu0 0
  %132 = vmatmul.mubr.bf16.gmra.mxu0 %v73
  %v133 = vpop.f32.mrf.mxu0
  %v134 = vadd.f32 %v48, %v133
  %v135 = vpop.f32.mrf.mxu0
  %v136 = vpop.f32.mrf.mxu0
  %v137 = vadd.f32 %v48, %v136
  %v138 = vpop.f32.mrf.mxu0
  %139 = vdwg.mxu0
  %v140 = vmax.f32 %v110, 0.0
  %v141 = vmax.f32 %v113, 0.0
  %v142 = vmax.f32 %v118, 0.0
  %v143 = vmax.f32 %v121, 0.0
  %v144 = vmax.f32 %v126, 0.0
  %v145 = vmax.f32 %v129, 0.0
  %v146 = vmax.f32 %v134, 0.0
  %v147 = vmax.f32 %v137, 0.0
  %v148 = vld [vmem:[%s3] sm:$0xf]
  %v149 = vld [vmem:[%s3 + $0x4] sm:$0xf]
  %v150 = vld [vmem:[%s3 + $0x8] sm:$0xf]
  %v151 = vld [vmem:[%s3 + $0xc] sm:$0xf]
  %v152 = vld [vmem:[%s3 + $0x10] sm:$0xf]
  %v153 = vld [vmem:[%s3 + $0x14] sm:$0xf]
  %v154 = vld [vmem:[%s3 + $0x18] sm:$0xf]
  %v155 = vld [vmem:[%s3 + $0x1c] sm:$0xf]
  %v156 = vld [vmem:[%s4] sm:$0x1]
  %v157 = vpack.c.bf16 %v141, %v140
  %v158 = vpack.c.bf16 %v143, %v142
  %v159 = vpack.c.bf16 %v145, %v144
  %v160 = vpack.c.bf16 %v147, %v146
  %v162 = vlaneseq
  %v163 = vshrl.u32 %v162, 7
  %v164 = vsub.s32 0, %v163
  %v165 = vrot.slane %v156, %v164
  %v175 = vunpack.c.l.b16 %v148
  %v176 = vunpack.c.l.b16 %v149
  %v177 = vunpack.c.l.b16 %v150
  %v178 = vunpack.c.l.b16 %v151
  %v179 = vunpack.c.l.b16 %v152
  %v180 = vunpack.c.l.b16 %v153
  %v181 = vunpack.c.l.b16 %v154
  %v182 = vunpack.c.l.b16 %v155
  %v183 = vpack.c.b16 %v176, %v175
  %v184 = vpack.c.b16 %v178, %v177
  %v185 = vpack.c.b16 %v180, %v179
  %v186 = vpack.c.b16 %v182, %v181
  %vm191 = vcmask 523264
  %v193 = vsel %vm191, %v157, 0
  %v196 = vsel %vm191, %v158, 0
  %v199 = vsel %vm191, %v159, 0
  %v202 = vsel %vm191, %v160, 0
  %204 = vmatprep.subr.bf16.mxu0 0
  %205 = vmatpush1.bf16.msra.mxu0 0
  %206 = vmatprep.subr.bf16.mxu0 0
  %207 = vmatpush1.bf16.msra.mxu0 0
  %208 = vmatprep.subr.bf16.mxu0 0
  %209 = vmatpush1.bf16.msra.mxu0 0
  %210 = vmatprep.subr.bf16.mxu0 0
  %211 = vmatpush1.bf16.msra.mxu0 0
  %212 = vmatprep.subr.bf16.mxu0 0
  %213 = vmatpush1.bf16.msra.mxu0 %v186
  %214 = vmatprep.subr.bf16.mxu0 0
  %215 = vmatpush1.bf16.msra.mxu0 %v185
  %216 = vmatprep.subr.bf16.mxu0 0
  %217 = vmatpush1.bf16.msra.mxu0 %v184
  %218 = vmatprep.subr.bf16.mxu0 0
  %219 = vmatpush1.bf16.msra.mxu0 %v183
  %220 = vmatprep.subr.bf16.mxu0 0
  %221 = vmatpush2.bf16.msra.mxu0 0
  %222 = vmatprep.subr.bf16.mxu0 0
  %223 = vmatpush2.bf16.msra.mxu0 0
  %224 = vmatprep.subr.bf16.mxu0 0
  %225 = vmatpush2.bf16.msra.mxu0 0
  %226 = vmatprep.subr.bf16.mxu0 0
  %227 = vmatpush2.bf16.msra.mxu0 0
  %228 = vmatprep.subr.bf16.mxu0 0
  %229 = vmatpush2.bf16.msra.mxu0 0
  %230 = vmatprep.subr.bf16.mxu0 0
  %231 = vmatpush2.bf16.msra.mxu0 0
  %232 = vmatprep.subr.bf16.mxu0 0
  %233 = vmatpush2.bf16.msra.mxu0 0
  %234 = vmatprep.subr.bf16.mxu0 0
  %235 = vmatpush2.bf16.msra.mxu0 0
  %236 = vmatprep.mubr.bf16.mxu0 0
  %237 = vmatmul.mubr.bf16.gmra.mxu0 %v193
  %v238 = vpop.f32.mrf.mxu0
  %v239 = vadd.f32 %v165, %v238
  %v240 = vpop.f32.mrf.mxu0
  %v241 = vpop.f32.mrf.mxu0
  %v242 = vadd.f32 %v165, %v241
  %v243 = vpop.f32.mrf.mxu0
  %244 = vmatprep.mubr.bf16.mxu0 0
  %245 = vmatmul.mubr.bf16.gmra.mxu0 %v196
  %v246 = vpop.f32.mrf.mxu0
  %v247 = vadd.f32 %v165, %v246
  %v248 = vpop.f32.mrf.mxu0
  %v249 = vpop.f32.mrf.mxu0
  %v250 = vadd.f32 %v165, %v249
  %v251 = vpop.f32.mrf.mxu0
  %252 = vmatprep.mubr.bf16.mxu0 0
  %253 = vmatmul.mubr.bf16.gmra.mxu0 %v199
  %v254 = vpop.f32.mrf.mxu0
  %v255 = vadd.f32 %v165, %v254
  %v256 = vpop.f32.mrf.mxu0
  %v257 = vpop.f32.mrf.mxu0
  %v258 = vadd.f32 %v165, %v257
  %v259 = vpop.f32.mrf.mxu0
  %260 = vmatprep.mubr.bf16.mxu0 0
  %261 = vmatmul.mubr.bf16.gmra.mxu0 %v202
  %v262 = vpop.f32.mrf.mxu0
  %v263 = vadd.f32 %v165, %v262
  %v264 = vpop.f32.mrf.mxu0
  %v265 = vpop.f32.mrf.mxu0
  %v266 = vadd.f32 %v165, %v265
  %v267 = vpop.f32.mrf.mxu0
  %268 = vdwg.mxu0
  %v269 = vmax.f32 %v239, 0.0
  %v270 = vmax.f32 %v242, 0.0
  %v271 = vmax.f32 %v247, 0.0
  %v272 = vmax.f32 %v250, 0.0
  %v273 = vmax.f32 %v255, 0.0
  %v274 = vmax.f32 %v258, 0.0
  %v275 = vmax.f32 %v263, 0.0
  %v276 = vmax.f32 %v266, 0.0
  %v277 = vld [vmem:[%s5] sm:$0xf]
  %v278 = vld [vmem:[%s5 + $0x4] sm:$0xf]
  %v279 = vld [vmem:[%s5 + $0x8] sm:$0xf]
  %v280 = vld [vmem:[%s5 + $0xc] sm:$0xf]
  %v281 = vld [vmem:[%s6] sm:$0x1]
  %v282 = vpack.c.bf16 %v270, %v269
  %v283 = vpack.c.bf16 %v272, %v271
  %v284 = vpack.c.bf16 %v274, %v273
  %v285 = vpack.c.bf16 %v276, %v275
  %v287 = vlaneseq
  %v288 = vshrl.u32 %v287, 7
  %v289 = vsub.s32 0, %v288
  %v290 = vrot.slane %v281, %v289
  %v296 = vunpack.c.l.b16 %v277
  %v297 = vunpack.c.l.b16 %v278
  %v298 = vunpack.c.l.b16 %v279
  %v299 = vunpack.c.l.b16 %v280
  %v300 = vpack.c.b16 %v297, %v296
  %v301 = vpack.c.b16 %v299, %v298
  %v305 = vsel %vm62, %v282, 0
  %v308 = vsel %vm62, %v283, 0
  %v311 = vsel %vm62, %v284, 0
  %v314 = vsel %vm62, %v285, 0
  %316 = vmatprep.subr.bf16.mxu0 0
  %317 = vmatpush1.bf16.msra.mxu0 0
  %318 = vmatprep.subr.bf16.mxu0 0
  %319 = vmatpush1.bf16.msra.mxu0 0
  %320 = vmatprep.subr.bf16.mxu0 0
  %321 = vmatpush1.bf16.msra.mxu0 0
  %322 = vmatprep.subr.bf16.mxu0 0
  %323 = vmatpush1.bf16.msra.mxu0 0
  %324 = vmatprep.subr.bf16.mxu0 0
  %325 = vmatpush1.bf16.msra.mxu0 0
  %326 = vmatprep.subr.bf16.mxu0 0
  %327 = vmatpush1.bf16.msra.mxu0 0
  %328 = vmatprep.subr.bf16.mxu0 0
  %329 = vmatpush1.bf16.msra.mxu0 %v301
  %330 = vmatprep.subr.bf16.mxu0 0
  %331 = vmatpush1.bf16.msra.mxu0 %v300
  %332 = vmatprep.subr.bf16.mxu0 0
  %333 = vmatpush2.bf16.msra.mxu0 0
  %334 = vmatprep.subr.bf16.mxu0 0
  %335 = vmatpush2.bf16.msra.mxu0 0
  %336 = vmatprep.subr.bf16.mxu0 0
  %337 = vmatpush2.bf16.msra.mxu0 0
  %338 = vmatprep.subr.bf16.mxu0 0
  %339 = vmatpush2.bf16.msra.mxu0 0
  %340 = vmatprep.subr.bf16.mxu0 0
  %341 = vmatpush2.bf16.msra.mxu0 0
  %342 = vmatprep.subr.bf16.mxu0 0
  %343 = vmatpush2.bf16.msra.mxu0 0
  %344 = vmatprep.subr.bf16.mxu0 0
  %345 = vmatpush2.bf16.msra.mxu0 0
  %346 = vmatprep.subr.bf16.mxu0 0
  %347 = vmatpush2.bf16.msra.mxu0 0
  %348 = vmatprep.mubr.bf16.mxu0 0
  %349 = vmatmul.mubr.bf16.gmra.mxu0 %v305
  %v350 = vpop.f32.mrf.mxu0
  %v351 = vadd.f32 %v290, %v350
  %v352 = vpop.f32.mrf.mxu0
  %v353 = vpop.f32.mrf.mxu0
  %v354 = vadd.f32 %v290, %v353
  %v355 = vpop.f32.mrf.mxu0
  %356 = vmatprep.mubr.bf16.mxu0 0
  %357 = vmatmul.mubr.bf16.gmra.mxu0 %v308
  %v358 = vpop.f32.mrf.mxu0
  %v359 = vadd.f32 %v290, %v358
  %v360 = vpop.f32.mrf.mxu0
  %v361 = vpop.f32.mrf.mxu0
  %v362 = vadd.f32 %v290, %v361
  %v363 = vpop.f32.mrf.mxu0
  %364 = vmatprep.mubr.bf16.mxu0 0
  %365 = vmatmul.mubr.bf16.gmra.mxu0 %v311
  %v366 = vpop.f32.mrf.mxu0
  %v367 = vadd.f32 %v290, %v366
  %v368 = vpop.f32.mrf.mxu0
  %v369 = vpop.f32.mrf.mxu0
  %v370 = vadd.f32 %v290, %v369
  %v371 = vpop.f32.mrf.mxu0
  %372 = vmatprep.mubr.bf16.mxu0 0
  %373 = vmatmul.mubr.bf16.gmra.mxu0 %v314
  %v374 = vpop.f32.mrf.mxu0
  %v375 = vadd.f32 %v290, %v374
  %v376 = vpop.f32.mrf.mxu0
  %v377 = vpop.f32.mrf.mxu0
  %v378 = vadd.f32 %v290, %v377
  %v379 = vpop.f32.mrf.mxu0
  %380 = vdwg.mxu0
  %vm381 = vcmask 64512
  %382 = vst.msk [vmem:[%s7] sm:$0xff] %vm381, %v351
  %383 = vst.msk [vmem:[%s7 + $0x8] sm:$0xff] %vm381, %v354
  %384 = vst.msk [vmem:[%s7 + $0x10] sm:$0xff] %vm381, %v359
  %385 = vst.msk [vmem:[%s7 + $0x18] sm:$0xff] %vm381, %v362
  %386 = vst.msk [vmem:[%s7 + $0x20] sm:$0xff] %vm381, %v367
  %387 = vst.msk [vmem:[%s7 + $0x28] sm:$0xff] %vm381, %v370
  %388 = vst.msk [vmem:[%s7 + $0x30] sm:$0xff] %vm381, %v375
  %389 = vst.msk [vmem:[%s7 + $0x38] sm:$0xff] %vm381, %v378
  // Predicated region
  $region30: #{prober_forward.1} parent=0 // pred_check
    _
  $region31: #{prober_forward.1} parent=0 // pred_check_branch
    %391 = sbr.rel (0) target = $region33
  $region32: #{prober_forward.1} parent=0 // pred_region
    _
  $region33: #{prober_forward.1} parent=0 // pred_fallthru
    _
  // Predicated region
  $region34: #{prober_forward.1} parent=0 // pred_check
    _
  $region35: #{prober_forward.1} parent=0 // pred_check_branch
    %393 = sbr.rel (0) target = $region37
  $region36: #{prober_forward.1} parent=0 // pred_region
    _
  $region37: #{prober_forward.1} parent=0 // pred_fallthru
    _

</llo_original>
